<compile_context>
chip_gen: v5e
topology: v5e:2x2
jax: 0.10.0
libtpu: 0.0.40
codegen_flags: <defaults>
</compile_context>

<pallas_src>
import jax
import jax.numpy as jnp
from jax.experimental import pallas as pl
from jax.experimental.pallas import tpu as pltpu

_LANE = 128


# ---------------------------------------------------------------------------
# Fused kernel: in-kernel GAP (accumulated over spatial tiles) + backbone fc,
# fc_open and mlp_proj heads, all on-chip.
# ---------------------------------------------------------------------------
def uagreg_fused_kernel(x_ref,                  # (b_blk, C, hw_blk)   bf16
                        wb_ref, bb_ref,         # (C, F_pad) bf16, (1, F_pad) f32
                        wcls_ref, bcls_ref,     # (F_pad, NCLS_PAD) bf16, (1, NCLS_PAD) f32
                        w1_ref, b1_ref,         # (F_pad, F_pad) bf16, (1, F_pad) f32
                        w2_ref, b2_ref,         # (F_pad, NPROJ_PAD) bf16, (1, NPROJ_PAD) f32
                        cls_ref,                # (b_blk, NCLS_PAD) f32
                        proj_ref,               # (b_blk, NPROJ_PAD) f32
                        gap_ref):               # (b_blk, C) f32 scratch
    j = pl.program_id(1)

    @pl.when(j == 0)
    def _init():
        gap_ref[...] = jnp.zeros_like(gap_ref)

    # Partial spatial sum for the GAP (f32 accumulation; 1/HW is folded into wb).
    gap_ref[...] += jnp.sum(x_ref[...].astype(jnp.float32), axis=-1)

    @pl.when(j == pl.num_programs(1) - 1)
    def _finalize():
        # Backbone: (GAP) -> Linear(C, F) -> ReLU.  feat stays on-chip.
        xg = gap_ref[...].astype(jnp.bfloat16)                       # (b_blk, C)
        feat = jnp.dot(xg, wb_ref[...],
                       preferred_element_type=jnp.float32) + bb_ref[...]
        feat = jnp.maximum(feat, 0.0)                                # f32
        feat_b = feat.astype(jnp.bfloat16)

        # Fused classifier heads: [backbone fc | fc_open | 0-pad], one
        # lane-dense 128-wide matmul + unmasked store.
        cls_ref[...] = (jnp.dot(feat_b, wcls_ref[...],
                                preferred_element_type=jnp.float32) + bcls_ref[...])

        # mlp_proj: Linear -> LeakyReLU(0.1) -> Linear -> l2norm.
        h = jnp.dot(feat_b, w1_ref[...],
                    preferred_element_type=jnp.float32) + b1_ref[...]
        h = jnp.maximum(h, 0.1 * h)                                  # LeakyReLU, f32
        p = jnp.dot(h.astype(jnp.bfloat16), w2_ref[...],
                    preferred_element_type=jnp.float32) + b2_ref[...]

        # l2norm: padded columns are exactly zero, so they don't change the
        # norm.  Clamp the squared norm (F.normalize-style eps) for safety.
        sumsq = jnp.maximum(jnp.sum(p * p, axis=1, keepdims=True), 1e-24)
        proj_ref[...] = p * jax.lax.rsqrt(sumsq)


# ---------------------------------------------------------------------------
# Wrapper helpers
# ---------------------------------------------------------------------------
def _round_up(n, m):
    return ((n + m - 1) // m) * m


def _vmem_cap_bytes():
    """Generation-aware VMEM budget ceiling for tile selection."""
    phys = 128 << 20
    try:
        phys = int(pltpu.get_tpu_info().vmem_capacity_bytes)
    except Exception:
        pass
    if phys <= (64 << 20):
        return 52 << 20            # v7x-class (64 MiB/TC): leave compiler headroom
    return 100 << 20               # v5e/v6e (128 MiB physical): go past the default


def _choose_tiles(B, C, HW, weight_bytes, ncls_pad, nproj_pad, cap_bytes):
    """Pick (b_blk, hw_blk) from the same explicit VMEM accounting used for
    vmem_limit_bytes.  Weights are budgeted double-buffered (conservative)."""
    headroom = 4 << 20
    hw_full = _round_up(HW, _LANE)

    def need(b, hw):
        x_tile = b * C * hw * 2            # bf16 x block
        x_f32 = b * C * hw * 4             # f32 upcast intermediate for the GAP sum
        out_tile = b * (ncls_pad + nproj_pad) * 4
        scratch = b * _LANE * 4            # GAP accumulator (lane-padded estimate)
        return 2 * weight_bytes + 2 * x_tile + x_f32 + 2 * out_tile + scratch + headroom

    b_blk, hw_blk = 8, min(hw_full, _LANE)
    b = min(512, _round_up(B, 8))
    while b >= 8:
        hw = hw_full
        while hw > _LANE and need(b, hw) > cap_bytes:
            hw -= _LANE
        if need(b, hw) <= cap_bytes:
            b_blk, hw_blk = b, hw
            break
        b -= 8

    # v7x has 2 TensorCores: make sure the "parallel" batch axis has >=2 programs.
    if B >= 16 and _round_up(B, b_blk) // b_blk < 2:
        b_blk = max(8, ((b_blk // 2) // 8) * 8)

    return b_blk, hw_blk, need(b_blk, hw_blk)


def pack_params(params, H, W):
    """One-time packing: fold 1/HW into wb, fuse the two classifier heads,
    lane-pad F / 2*num_classes / proj_dim to 128, cast matmul weights to bf16."""
    HW = H * W
    wb = jnp.asarray(params["wb"], jnp.float32)
    C, F = wb.shape
    nc = params["wfc"].shape[1]
    pd = params["w2"].shape[1]

    f_pad = _round_up(max(F, 1), _LANE)
    ncls_pad = _round_up(max(2 * nc, 1), _LANE)
    nproj_pad = _round_up(max(pd, 1), _LANE)

    def padded(arr, shape):
        out = jnp.zeros(shape, jnp.float32)
        return out.at[: arr.shape[0], : arr.shape[1]].set(arr)

    # Backbone Linear with the GAP's 1/HW folded in (no H*W expansion).
    wbp = padded(wb * (1.0 / HW), (C, f_pad)).astype(jnp.bfloat16)
    bbp = padded(params["bb"], (1, f_pad))                    # f32 bias

    # Fused heads: [backbone fc | fc_open | zero pad], lane-dense.
    wcls = jnp.zeros((f_pad, ncls_pad), jnp.float32)
    wcls = wcls.at[:F, :nc].set(params["wfc"]).at[:F, nc:2 * nc].set(params["wopen"])
    bcls = jnp.zeros((1, ncls_pad), jnp.float32)
    bcls = bcls.at[:, :nc].set(params["bfc"]).at[:, nc:2 * nc].set(params["bopen"])

    return {
        "wb": wbp, "bb": bbp,
        "wcls": wcls.astype(jnp.bfloat16), "bcls": bcls,
        "w1": padded(params["w1"], (f_pad, f_pad)).astype(jnp.bfloat16),
        "b1": padded(params["b1"], (1, f_pad)),
        "w2": padded(params["w2"], (f_pad, nproj_pad)).astype(jnp.bfloat16),
        "b2": padded(params["b2"], (1, nproj_pad)),
        "num_classes": int(nc), "proj_dim": int(pd),
        "in_channels": int(C), "hw": int(HW),
    }


def uagreg_forward(x, packed):
    B, C, H, W = x.shape
    HW = H * W
    assert C == packed["in_channels"] and HW == packed["hw"]
    ncls_pad = packed["wcls"].shape[1]
    nproj_pad = packed["w2"].shape[1]
    nc = packed["num_classes"]
    pd = packed["proj_dim"]

    weight_bytes = sum(int(packed[k].size) * packed[k].dtype.itemsize
                       for k in ("wb", "bb", "wcls", "bcls", "w1", "b1", "w2", "b2"))

    cap = _vmem_cap_bytes()
    b_blk, hw_blk, need = _choose_tiles(B, C, HW, weight_bytes,
                                        ncls_pad, nproj_pad, cap)
    b_pad = _round_up(B, b_blk)
    hw_pad = _round_up(HW, hw_blk)

    # bf16 x stream (halves HBM traffic); zero-pad batch / spatial (zeros are
    # exact no-ops: the 1/HW scale uses the true HW, padded rows are sliced off).
    x3 = x.reshape(B, C, HW).astype(jnp.bfloat16)
    if b_pad != B or hw_pad != HW:
        x3 = jnp.pad(x3, ((0, b_pad - B), (0, 0), (0, hw_pad - HW)))

    grid = (b_pad // b_blk, hw_pad // hw_blk)

    def wspec(arr):          # grid-invariant weights/biases: fetched once
        return pl.BlockSpec(arr.shape, lambda i, j: (0, 0))

    vmem_limit = int(max(need, 32 << 20))

    cls_pad, proj_pad = pl.pallas_call(
        uagreg_fused_kernel,
        out_shape=(
            jax.ShapeDtypeStruct((b_pad, ncls_pad), jnp.float32),
            jax.ShapeDtypeStruct((b_pad, nproj_pad), jnp.float32),
        ),
        grid_spec=pltpu.PrefetchScalarGridSpec(
            num_scalar_prefetch=0,
            grid=grid,
            in_specs=[
                pl.BlockSpec((b_blk, C, hw_blk), lambda i, j: (i, 0, j)),
                wspec(packed["wb"]), wspec(packed["bb"]),
                wspec(packed["wcls"]), wspec(packed["bcls"]),
                wspec(packed["w1"]), wspec(packed["b1"]),
                wspec(packed["w2"]), wspec(packed["b2"]),
            ],
            out_specs=[
                pl.BlockSpec((b_blk, ncls_pad), lambda i, j: (i, 0)),
                pl.BlockSpec((b_blk, nproj_pad), lambda i, j: (i, 0)),
            ],
            scratch_shapes=[pltpu.VMEM((b_blk, C), jnp.float32)],
        ),
        compiler_params=pltpu.CompilerParams(
            dimension_semantics=("parallel", "arbitrary"),
            vmem_limit_bytes=vmem_limit,
        ),
    )(x3,
      packed["wb"], packed["bb"],
      packed["wcls"], packed["bcls"],
      packed["w1"], packed["b1"],
      packed["w2"], packed["b2"])

    # Slice lane/batch-padded slabs back to the module's output shapes.
    return {
        "logits": cls_pad[:B, :nc],
        "logits_open": cls_pad[:B, nc:2 * nc],
        "feat": proj_pad[:B, :pd],
    }


# ---------------------------------------------------------------------------
# Deterministic parameter init (mirrors shapes implied by __init__)
# ---------------------------------------------------------------------------
def init_params(key, in_channels, feat_planes, num_classes):
    proj_dim = feat_planes // 2 if feat_planes <= 256 else 128
    ks = jax.random.split(key, 8)

    def nrm(k, shape, std):
        return (std * jax.random.normal(k, shape)).astype(jnp.float32)

    return {
        # synthetic backbone: Linear(C, feat_planes) after global average pool, ReLU
        "wb": nrm(ks[0], (in_channels, feat_planes), 0.1),
        "bb": jnp.zeros((1, feat_planes), jnp.float32),
        # backbone classifier head (only_fc): Linear(feat_planes, num_classes)
        "wfc": nrm(ks[1], (feat_planes, num_classes), 0.1),
        "bfc": jnp.zeros((1, num_classes), jnp.float32),
        # fc_open: xavier_normal_ weight, zero bias
        "wopen": nrm(ks[2], (feat_planes, num_classes),
                     (2.0 / (feat_planes + num_classes)) ** 0.5),
        "bopen": jnp.zeros((1, num_classes), jnp.float32),
        # mlp_proj: Linear(F, F) -> LeakyReLU(0.1) -> Linear(F, proj_dim)
        "w1": nrm(ks[3], (feat_planes, feat_planes), 0.1),
        "b1": nrm(ks[4], (1, feat_planes), 0.01),
        "w2": nrm(ks[5], (feat_planes, proj_dim), 0.1),
        "b2": nrm(ks[6], (1, proj_dim), 0.01),
    }


def reference_forward(x, params):
    """Pure-JAX f32 reference matching the PyTorch module semantics."""
    B, C = x.shape[0], x.shape[1]
    xg = x.reshape(B, C, -1).mean(axis=-1)
    feat = jnp.maximum(xg @ params["wb"] + params["bb"], 0.0)
    logits = feat @ params["wfc"] + params["bfc"]
    logits_open = feat @ params["wopen"] + params["bopen"]
    h = feat @ params["w1"] + params["b1"]
    h = jnp.where(h >= 0, h, 0.1 * h)
    p = h @ params["w2"] + params["b2"]
    p = p / jnp.sqrt(jnp.sum(p * p, axis=1, keepdims=True))
    return logits, logits_open, p


if __name__ == "__main__":
    key = jax.random.PRNGKey(0)
    k_x, k_p = jax.random.split(key)

    # Small shapes consistent with the module.
    B, C, H, W = 2, 4, 16, 16
    feat_planes = 32          # base.num_features
    num_classes = 6
    # proj_dim = feat_planes // 2 = 16 (feat_planes <= 256)

    x = jax.random.normal(k_x, (B, C, H, W), dtype=jnp.float32)
    params = init_params(k_p, C, feat_planes, num_classes)
    packed = pack_params(params, H, W)

    out = uagreg_forward(x, packed)
    jax.block_until_ready(out)

    assert out["logits"].shape == (B, num_classes)
    assert out["logits_open"].shape == (B, num_classes)
    assert out["feat"].shape == (B, feat_planes // 2)

    # l2norm sanity: projected features are unit-norm.
    norms = jnp.sqrt(jnp.sum(out["feat"] ** 2, axis=1))
    assert bool(jnp.all(jnp.abs(norms - 1.0) < 1e-3))

    # Everything finite.
    for v in out.values():
        assert bool(jnp.all(jnp.isfinite(v)))

    # Loose numeric check vs. an f32 pure-JAX reference (bf16 matmul inputs,
    # f32 accumulation -> small deviations expected).
    ref_logits, ref_open, ref_feat = reference_forward(x, params)
    assert bool(jnp.max(jnp.abs(out["logits"] - ref_logits)) < 1e-2)
    assert bool(jnp.max(jnp.abs(out["logits_open"] - ref_open)) < 1e-2)
    assert bool(jnp.max(jnp.abs(out["feat"] - ref_feat)) < 5e-2)

    print("KERNEL_OK")
</pallas_src>

<mosaic_0001>
module attributes {stable_mosaic.version = 11 : i64} {
  func.func @uagreg_fused_kernel(%arg0: i32, %arg1: i32, %arg2: memref<8x4x256xbf16, #tpu.memory_space<vmem>>, %arg3: memref<4x128xbf16, #tpu.memory_space<vmem>>, %arg4: memref<1x128xf32, #tpu.memory_space<vmem>>, %arg5: memref<128x128xbf16, #tpu.memory_space<vmem>>, %arg6: memref<1x128xf32, #tpu.memory_space<vmem>>, %arg7: memref<128x128xbf16, #tpu.memory_space<vmem>>, %arg8: memref<1x128xf32, #tpu.memory_space<vmem>>, %arg9: memref<128x128xbf16, #tpu.memory_space<vmem>>, %arg10: memref<1x128xf32, #tpu.memory_space<vmem>>, %arg11: memref<8x128xf32, #tpu.memory_space<vmem>>, %arg12: memref<8x128xf32, #tpu.memory_space<vmem>>, %arg13: memref<8x4xf32, #tpu.memory_space<vmem>>) attributes {dimension_semantics = [#tpu.dimension_semantics<parallel>, #tpu.dimension_semantics<arbitrary>], iteration_bounds = array<i64: 1, 1>, scalar_prefetch = 0 : i64, scratch_operands = 1 : i64, tpu.core_type = #tpu.core_type<tc>, window_params = [{transform_indices = @transform_0, window_bounds = array<i64: 8, 4, 256>}, {pipeline_mode = #tpu.pipeline_mode<synchronous>, transform_indices = @transform_1, window_bounds = array<i64: 4, 128>}, {pipeline_mode = #tpu.pipeline_mode<synchronous>, transform_indices = @transform_2, window_bounds = array<i64: 1, 128>}, {pipeline_mode = #tpu.pipeline_mode<synchronous>, transform_indices = @transform_3, window_bounds = array<i64: 128, 128>}, {pipeline_mode = #tpu.pipeline_mode<synchronous>, transform_indices = @transform_4, window_bounds = array<i64: 1, 128>}, {pipeline_mode = #tpu.pipeline_mode<synchronous>, transform_indices = @transform_5, window_bounds = array<i64: 128, 128>}, {pipeline_mode = #tpu.pipeline_mode<synchronous>, transform_indices = @transform_6, window_bounds = array<i64: 1, 128>}, {pipeline_mode = #tpu.pipeline_mode<synchronous>, transform_indices = @transform_7, window_bounds = array<i64: 128, 128>}, {pipeline_mode = #tpu.pipeline_mode<synchronous>, transform_indices = @transform_8, window_bounds = array<i64: 1, 128>}, {transform_indices = @transform_9, window_bounds = array<i64: 8, 128>}, {transform_indices = @transform_10, window_bounds = array<i64: 8, 128>}]} {
    %c0_i32 = arith.constant 0 : i32
    %0 = arith.cmpi eq, %arg1, %c0_i32 : i32
    %1 = arith.extui %0 : i1 to i32
    %c0_i32_0 = arith.constant 0 : i32
    %2 = arith.cmpi ne, %1, %c0_i32_0 : i32
    scf.if %2 {
      %cst_9 = arith.constant 0.000000e+00 : f32
      %12 = vector.broadcast %cst_9 : f32 to vector<8x4xf32>
      %c0_10 = arith.constant 0 : index
      %c0_11 = arith.constant 0 : index
      %13 = vector.load %arg13[%c0_10, %c0_11] : memref<8x4xf32, #tpu.memory_space<vmem>>, vector<8x4xf32>
      tpu.vector_store %arg13[%c0_10, %c0_11], %12 {strides = array<i32>} : memref<8x4xf32, #tpu.memory_space<vmem>>, vector<8x4xf32>,
    } else {
    }
    %c0 = arith.constant 0 : index
    %c0_1 = arith.constant 0 : index
    %3 = vector.load %arg13[%c0, %c0_1] : memref<8x4xf32, #tpu.memory_space<vmem>>, vector<8x4xf32>
    %c0_2 = arith.constant 0 : index
    %c0_3 = arith.constant 0 : index
    %c0_4 = arith.constant 0 : index
    %4 = vector.load %arg2[%c0_2, %c0_3, %c0_4] : memref<8x4x256xbf16, #tpu.memory_space<vmem>>, vector<8x4x256xbf16>
    %5 = arith.extf %4 : vector<8x4x256xbf16> to vector<8x4x256xf32>
    %cst = arith.constant dense<0.000000e+00> : vector<8x4xf32>
    %6 = vector.multi_reduction <add>, %5, %cst [2] : vector<8x4x256xf32> to vector<8x4xf32>
    %7 = arith.addf %3, %6 : vector<8x4xf32>
    %c0_5 = arith.constant 0 : index
    %c0_6 = arith.constant 0 : index
    %8 = vector.load %arg13[%c0_5, %c0_6] : memref<8x4xf32, #tpu.memory_space<vmem>>, vector<8x4xf32>
    tpu.vector_store %arg13[%c0_5, %c0_6], %7 {strides = array<i32>} : memref<8x4xf32, #tpu.memory_space<vmem>>, vector<8x4xf32>,
    %c0_i32_7 = arith.constant 0 : i32
    %9 = arith.cmpi eq, %arg1, %c0_i32_7 : i32
    %10 = arith.extui %9 : i1 to i32
    %c0_i32_8 = arith.constant 0 : i32
    %11 = arith.cmpi ne, %10, %c0_i32_8 : i32
    scf.if %11 {
      %c0_9 = arith.constant 0 : index
      %c0_10 = arith.constant 0 : index
      %12 = vector.load %arg13[%c0_9, %c0_10] : memref<8x4xf32, #tpu.memory_space<vmem>>, vector<8x4xf32>
      %13 = arith.truncf %12 : vector<8x4xf32> to vector<8x4xbf16>
      %c0_11 = arith.constant 0 : index
      %c0_12 = arith.constant 0 : index
      %14 = vector.load %arg3[%c0_11, %c0_12] : memref<4x128xbf16, #tpu.memory_space<vmem>>, vector<4x128xbf16>
      %cst_13 = arith.constant dense<0.000000e+00> : vector<8x128xf32>
      %15 = tpu.matmul %13, %14, %cst_13 {dimension_numbers = #tpu.dot_dimension_numbers<[1], [0], [0], [1], [0, 0, 1, 1], [], []>} : vector<8x4xbf16>, vector<4x128xbf16>, vector<8x128xf32> -> vector<8x128xf32>
      %c0_14 = arith.constant 0 : index
      %c0_15 = arith.constant 0 : index
      %16 = vector.load %arg4[%c0_14, %c0_15] : memref<1x128xf32, #tpu.memory_space<vmem>>, vector<1x128xf32>
      %17 = vector.broadcast %16 : vector<1x128xf32> to vector<8x128xf32>
      %18 = arith.addf %15, %17 : vector<8x128xf32>
      %cst_16 = arith.constant 0.000000e+00 : f32
      %19 = vector.broadcast %cst_16 : f32 to vector<8x128xf32>
      %20 = arith.maximumf %18, %19 : vector<8x128xf32>
      %21 = arith.truncf %20 : vector<8x128xf32> to vector<8x128xbf16>
      %c0_17 = arith.constant 0 : index
      %c0_18 = arith.constant 0 : index
      %22 = vector.load %arg5[%c0_17, %c0_18] : memref<128x128xbf16, #tpu.memory_space<vmem>>, vector<128x128xbf16>
      %cst_19 = arith.constant dense<0.000000e+00> : vector<8x128xf32>
      %23 = tpu.matmul %21, %22, %cst_19 {dimension_numbers = #tpu.dot_dimension_numbers<[1], [0], [0], [1], [0, 0, 1, 1], [], []>} : vector<8x128xbf16>, vector<128x128xbf16>, vector<8x128xf32> -> vector<8x128xf32>
      %c0_20 = arith.constant 0 : index
      %c0_21 = arith.constant 0 : index
      %24 = vector.load %arg6[%c0_20, %c0_21] : memref<1x128xf32, #tpu.memory_space<vmem>>, vector<1x128xf32>
      %25 = vector.broadcast %24 : vector<1x128xf32> to vector<8x128xf32>
      %26 = arith.addf %23, %25 : vector<8x128xf32>
      %c0_22 = arith.constant 0 : index
      %c0_23 = arith.constant 0 : index
      %27 = vector.load %arg11[%c0_22, %c0_23] : memref<8x128xf32, #tpu.memory_space<vmem>>, vector<8x128xf32>
      tpu.vector_store %arg11[%c0_22, %c0_23], %26 {strides = array<i32>} : memref<8x128xf32, #tpu.memory_space<vmem>>, vector<8x128xf32>,
      %c0_24 = arith.constant 0 : index
      %c0_25 = arith.constant 0 : index
      %28 = vector.load %arg7[%c0_24, %c0_25] : memref<128x128xbf16, #tpu.memory_space<vmem>>, vector<128x128xbf16>
      %cst_26 = arith.constant dense<0.000000e+00> : vector<8x128xf32>
      %29 = tpu.matmul %21, %28, %cst_26 {dimension_numbers = #tpu.dot_dimension_numbers<[1], [0], [0], [1], [0, 0, 1, 1], [], []>} : vector<8x128xbf16>, vector<128x128xbf16>, vector<8x128xf32> -> vector<8x128xf32>
      %c0_27 = arith.constant 0 : index
      %c0_28 = arith.constant 0 : index
      %30 = vector.load %arg8[%c0_27, %c0_28] : memref<1x128xf32, #tpu.memory_space<vmem>>, vector<1x128xf32>
      %31 = vector.broadcast %30 : vector<1x128xf32> to vector<8x128xf32>
      %32 = arith.addf %29, %31 : vector<8x128xf32>
      %cst_29 = arith.constant 1.000000e-01 : f32
      %33 = vector.broadcast %cst_29 : f32 to vector<8x128xf32>
      %34 = arith.mulf %33, %32 : vector<8x128xf32>
      %35 = arith.maximumf %32, %34 : vector<8x128xf32>
      %36 = arith.truncf %35 : vector<8x128xf32> to vector<8x128xbf16>
      %c0_30 = arith.constant 0 : index
      %c0_31 = arith.constant 0 : index
      %37 = vector.load %arg9[%c0_30, %c0_31] : memref<128x128xbf16, #tpu.memory_space<vmem>>, vector<128x128xbf16>
      %cst_32 = arith.constant dense<0.000000e+00> : vector<8x128xf32>
      %38 = tpu.matmul %36, %37, %cst_32 {dimension_numbers = #tpu.dot_dimension_numbers<[1], [0], [0], [1], [0, 0, 1, 1], [], []>} : vector<8x128xbf16>, vector<128x128xbf16>, vector<8x128xf32> -> vector<8x128xf32>
      %c0_33 = arith.constant 0 : index
      %c0_34 = arith.constant 0 : index
      %39 = vector.load %arg10[%c0_33, %c0_34] : memref<1x128xf32, #tpu.memory_space<vmem>>, vector<1x128xf32>
      %40 = vector.broadcast %39 : vector<1x128xf32> to vector<8x128xf32>
      %41 = arith.addf %38, %40 : vector<8x128xf32>
      %42 = arith.mulf %41, %41 : vector<8x128xf32>
      %cst_35 = arith.constant dense<0.000000e+00> : vector<8xf32>
      %43 = vector.multi_reduction <add>, %42, %cst_35 [1] : vector<8x128xf32> to vector<8xf32>
      %44 = vector.shape_cast %43 : vector<8xf32> to vector<8x1xf32>
      %cst_36 = arith.constant 1.000000e-24 : f32
      %45 = vector.broadcast %cst_36 : f32 to vector<8x1xf32>
      %46 = arith.maximumf %44, %45 : vector<8x1xf32>
      %47 = math.rsqrt %46 : vector<8x1xf32>
      %48 = vector.broadcast %47 : vector<8x1xf32> to vector<8x128xf32>
      %49 = arith.mulf %41, %48 : vector<8x128xf32>
      %c0_37 = arith.constant 0 : index
      %c0_38 = arith.constant 0 : index
      %50 = vector.load %arg12[%c0_37, %c0_38] : memref<8x128xf32, #tpu.memory_space<vmem>>, vector<8x128xf32>
      tpu.vector_store %arg12[%c0_37, %c0_38], %49 {strides = array<i32>} : memref<8x128xf32, #tpu.memory_space<vmem>>, vector<8x128xf32>,
    } else {
    }
    return
  }
  func.func @transform_0(%arg0: i32, %arg1: i32) -> (i32, i32, i32) {
    %c0_i32 = arith.constant 0 : i32
    %c0_i32_0 = arith.constant 0 : i32
    return %arg0, %c0_i32, %arg1 : i32, i32, i32
  }
  func.func @transform_1(%arg0: i32, %arg1: i32) -> (i32, i32) {
    %c0_i32 = arith.constant 0 : i32
    %c0_i32_0 = arith.constant 0 : i32
    %c0_i32_1 = arith.constant 0 : i32
    return %c0_i32, %c0_i32_0 : i32, i32
  }
  func.func @transform_2(%arg0: i32, %arg1: i32) -> (i32, i32) {
    %c0_i32 = arith.constant 0 : i32
    %c0_i32_0 = arith.constant 0 : i32
    %c0_i32_1 = arith.constant 0 : i32
    return %c0_i32, %c0_i32_0 : i32, i32
  }
  func.func @transform_3(%arg0: i32, %arg1: i32) -> (i32, i32) {
    %c0_i32 = arith.constant 0 : i32
    %c0_i32_0 = arith.constant 0 : i32
    %c0_i32_1 = arith.constant 0 : i32
    return %c0_i32, %c0_i32_0 : i32, i32
  }
  func.func @transform_4(%arg0: i32, %arg1: i32) -> (i32, i32) {
    %c0_i32 = arith.constant 0 : i32
    %c0_i32_0 = arith.constant 0 : i32
    %c0_i32_1 = arith.constant 0 : i32
    return %c0_i32, %c0_i32_0 : i32, i32
  }
  func.func @transform_5(%arg0: i32, %arg1: i32) -> (i32, i32) {
    %c0_i32 = arith.constant 0 : i32
    %c0_i32_0 = arith.constant 0 : i32
    %c0_i32_1 = arith.constant 0 : i32
    return %c0_i32, %c0_i32_0 : i32, i32
  }
  func.func @transform_6(%arg0: i32, %arg1: i32) -> (i32, i32) {
    %c0_i32 = arith.constant 0 : i32
    %c0_i32_0 = arith.constant 0 : i32
    %c0_i32_1 = arith.constant 0 : i32
    return %c0_i32, %c0_i32_0 : i32, i32
  }
  func.func @transform_7(%arg0: i32, %arg1: i32) -> (i32, i32) {
    %c0_i32 = arith.constant 0 : i32
    %c0_i32_0 = arith.constant 0 : i32
    %c0_i32_1 = arith.constant 0 : i32
    return %c0_i32, %c0_i32_0 : i32, i32
  }
  func.func @transform_8(%arg0: i32, %arg1: i32) -> (i32, i32) {
    %c0_i32 = arith.constant 0 : i32
    %c0_i32_0 = arith.constant 0 : i32
    %c0_i32_1 = arith.constant 0 : i32
    return %c0_i32, %c0_i32_0 : i32, i32
  }
  func.func @transform_9(%arg0: i32, %arg1: i32) -> (i32, i32) {
    %c0_i32 = arith.constant 0 : i32
    %c0_i32_0 = arith.constant 0 : i32
    return %arg0, %c0_i32 : i32, i32
  }
  func.func @transform_10(%arg0: i32, %arg1: i32) -> (i32, i32) {
    %c0_i32 = arith.constant 0 : i32
    %c0_i32_0 = arith.constant 0 : i32
    return %arg0, %c0_i32 : i32, i32
  }
}

</mosaic_0001>

<llo_original>
// kernel: tpu_custom_call.1
$region0: #{tpu_custom_call.1}
  #allocation0 [shape = 'u32[]', space=smem, size = 0x4, offset = 0x4, fixed_abs, tag = 'smem constant byte address 0x4 - core index']
  #allocation1 [shape = 'u32[72,128]{1,0:T(1,128)}', space=vmem, size = 0x9000, scoped, tag = 'internal scratch']
  #allocation2 [shape = 'f32[8,4]{1,0:T(8,128)}', space=vmem, size = 0x1000, scoped, tag = 'scratch operand']
  %s0 = inlined_call_operand.hbm [shape: bf16[8,4,256], index: 0, kind: input, shape index: {}]
  %s1 = inlined_call_operand.hbm [shape: bf16[4,128], index: 1, kind: input, shape index: {}]
  %s2 = inlined_call_operand.vmem [shape: f32[1,128], index: 2, kind: input, shape index: {}]
  %s3 = inlined_call_operand.hbm [shape: bf16[128,128], index: 3, kind: input, shape index: {}]
  %s4 = inlined_call_operand.vmem [shape: f32[1,128], index: 4, kind: input, shape index: {}]
  %s5 = inlined_call_operand.hbm [shape: bf16[128,128], index: 5, kind: input, shape index: {}]
  %s6 = inlined_call_operand.vmem [shape: f32[1,128], index: 6, kind: input, shape index: {}]
  %s7 = inlined_call_operand.hbm [shape: bf16[128,128], index: 7, kind: input, shape index: {}]
  %s8 = inlined_call_operand.vmem [shape: f32[1,128], index: 8, kind: input, shape index: {}]
  %s9 = inlined_call_operand.hbm [shape: f32[8,128], index: 9, kind: output, shape index: {0}]
  %s10 = inlined_call_operand.hbm [shape: f32[8,128], index: 10, kind: output, shape index: {1}]
  %11 = xla_tuple %s9, %s10
  %s12 = sld [smem:[#allocation0]]
  $region82: #{tpu_custom_call.1} parent=0
    _
  %s14 = ssub.s32 1, %s12
  %s15 = scalar_select 0, %s14, %s12
  $region1: #{tpu_custom_call.1} parent=0
    #allocation3 [shape = 'u8[16384]{0}', space=vmem, size = 0x4000, scoped, tag = 'input window, operand 0, single buffered']
    #allocation4 [shape = 's32[1]{0}', space=sflag, size = 0x4, scoped, tag = 'scoped memory for tpu_custom_call.1']
    #allocation5 [shape = 's32[1]{0}', space=sflag, size = 0x4, scoped, tag = 'scoped memory for tpu_custom_call.1']
    #allocation6 [shape = 'u8[1024]{0}', space=vmem, size = 0x400, scoped, tag = 'input window, operand 1, single buffered']
    #allocation7 [shape = 's32[1]{0}', space=sflag, size = 0x4, scoped, tag = 'scoped memory for tpu_custom_call.1']
    #allocation8 [shape = 'u8[32768]{0}', space=vmem, size = 0x8000, scoped, tag = 'input window, operand 3, single buffered']
    #allocation9 [shape = 'u8[32768]{0}', space=vmem, size = 0x8000, scoped, tag = 'input window, operand 5, single buffered']
    #allocation10 [shape = 's32[1]{0}', space=sflag, size = 0x4, scoped, tag = 'scoped memory for tpu_custom_call.1']
    #allocation11 [shape = 'u8[32768]{0}', space=vmem, size = 0x8000, scoped, tag = 'input window, operand 7, single buffered']
    #allocation12 [shape = 'u8[4096]{0}', space=vmem, size = 0x1000, scoped, tag = 'output window, operand 0, single buffered']
    #allocation13 [shape = 'u8[4096]{0}', space=vmem, size = 0x1000, scoped, tag = 'output window, operand 1, single buffered']
    #allocation14 [shape = 's32[1]{0}', space=sflag, size = 0x4, scoped, tag = 'scoped memory for tpu_custom_call.1']
    %16 = vsyncpa [#allocation4], 0
    %17 = vsyncpa [#allocation7], 0
    %18 = vsyncpa [#allocation10], 0
    %19 = vsyncpa [#allocation5], 0
    %20 = vsyncpa [#allocation14], 0
    // Predicated region
    $region2: #{tpu_custom_call.1} parent=1 // pred_check
      _
    $region3: #{tpu_custom_call.1} parent=1 // pred_check_branch
      %22 = sbr.rel (0) target = $region5
    $region4: #{tpu_custom_call.1} parent=1 // pred_region
      %24 = vsyncadd [#allocation4], 0
      %s25 = sshll.u32 %s0, 4
      %s26 = int_to_ptr.hbm [resolvable:$true] %s25
      %s27 = sshll.u32 [#allocation3], 4
      %s28 = int_to_ptr.vmem [resolvable:$true] %s27
      %33 = dma.hbm_to_vmem [thread:$0]  %s26, 512, %s28, [#allocation4], 64, 64, 4
    $region5: #{tpu_custom_call.1} parent=1 // pred_fallthru
      _
    // Predicated region
    $region6: #{tpu_custom_call.1} parent=1 // pred_check
      _
    $region7: #{tpu_custom_call.1} parent=1 // pred_check_branch
      %35 = sbr.rel (0) target = $region9
    $region8: #{tpu_custom_call.1} parent=1 // pred_region
      %37 = vsyncadd [#allocation7], 0
      %s39 = sshll.u32 %s1, 4
      %s40 = int_to_ptr.hbm [resolvable:$true] %s39
      %s41 = sshll.u32 [#allocation6], 4
      %s42 = int_to_ptr.vmem [resolvable:$true] %s41
      %44 = dma.hbm_to_vmem [thread:$0]  %s40, 32, %s42, [#allocation7]
    $region9: #{tpu_custom_call.1} parent=1 // pred_fallthru
      _
    // Predicated region
    $region10: #{tpu_custom_call.1} parent=1 // pred_check
      _
    $region11: #{tpu_custom_call.1} parent=1 // pred_check_branch
      %46 = sbr.rel (0) target = $region13
    $region12: #{tpu_custom_call.1} parent=1 // pred_region
      _
    $region13: #{tpu_custom_call.1} parent=1 // pred_fallthru
      _
    // Predicated region
    $region14: #{tpu_custom_call.1} parent=1 // pred_check
      _
    $region15: #{tpu_custom_call.1} parent=1 // pred_check_branch
      %48 = sbr.rel (0) target = $region17
    $region16: #{tpu_custom_call.1} parent=1 // pred_region
      %50 = vsyncadd [#allocation7], 0
      %s51 = sshll.u32 %s3, 4
      %s52 = int_to_ptr.hbm [resolvable:$true] %s51
      %s53 = sshll.u32 [#allocation8], 4
      %s54 = int_to_ptr.vmem [resolvable:$true] %s53
      %59 = dma.hbm_to_vmem [thread:$0]  %s52, 1024, %s54, [#allocation7], 64, 64, 4
    $region17: #{tpu_custom_call.1} parent=1 // pred_fallthru
      _
    // Predicated region
    $region18: #{tpu_custom_call.1} parent=1 // pred_check
      _
    $region19: #{tpu_custom_call.1} parent=1 // pred_check_branch
      %61 = sbr.rel (0) target = $region21
    $region20: #{tpu_custom_call.1} parent=1 // pred_region
      _
    $region21: #{tpu_custom_call.1} parent=1 // pred_fallthru
      _
    // Predicated region
    $region22: #{tpu_custom_call.1} parent=1 // pred_check
      _
    $region23: #{tpu_custom_call.1} parent=1 // pred_check_branch
      %63 = sbr.rel (0) target = $region25
    $region24: #{tpu_custom_call.1} parent=1 // pred_region
      %65 = vsyncadd [#allocation10], 0
      %s66 = sshll.u32 %s5, 4
      %s67 = int_to_ptr.hbm [resolvable:$true] %s66
      %s68 = sshll.u32 [#allocation9], 4
      %s69 = int_to_ptr.vmem [resolvable:$true] %s68
      %74 = dma.hbm_to_vmem [thread:$0]  %s67, 1024, %s69, [#allocation10], 64, 64, 4
    $region25: #{tpu_custom_call.1} parent=1 // pred_fallthru
      _
    // Predicated region
    $region26: #{tpu_custom_call.1} parent=1 // pred_check
      _
    $region27: #{tpu_custom_call.1} parent=1 // pred_check_branch
      %76 = sbr.rel (0) target = $region29
    $region28: #{tpu_custom_call.1} parent=1 // pred_region
      _
    $region29: #{tpu_custom_call.1} parent=1 // pred_fallthru
      _
    // Predicated region
    $region30: #{tpu_custom_call.1} parent=1 // pred_check
      _
    $region31: #{tpu_custom_call.1} parent=1 // pred_check_branch
      %78 = sbr.rel (0) target = $region33
    $region32: #{tpu_custom_call.1} parent=1 // pred_region
      %80 = vsyncadd [#allocation10], 0
      %s81 = sshll.u32 %s7, 4
      %s82 = int_to_ptr.hbm [resolvable:$true] %s81
      %s83 = sshll.u32 [#allocation11], 4
      %s84 = int_to_ptr.vmem [resolvable:$true] %s83
      %89 = dma.hbm_to_vmem [thread:$0]  %s82, 1024, %s84, [#allocation10], 64, 64, 4
    $region33: #{tpu_custom_call.1} parent=1 // pred_fallthru
      _
    // Predicated region
    $region34: #{tpu_custom_call.1} parent=1 // pred_check
      _
    $region35: #{tpu_custom_call.1} parent=1 // pred_check_branch
      %91 = sbr.rel (0) target = $region37
    $region36: #{tpu_custom_call.1} parent=1 // pred_region
      _
    $region37: #{tpu_custom_call.1} parent=1 // pred_fallthru
      _
    // Predicated region
    $region38: #{tpu_custom_call.1} parent=1 // pred_check
      _
    $region39: #{tpu_custom_call.1} parent=1 // pred_check_branch
      %93 = sbr.rel (0) target = $region41
    $region40: #{tpu_custom_call.1} parent=1 // pred_region
      %95 = dma.done [#allocation4], 512
    $region41: #{tpu_custom_call.1} parent=1 // pred_fallthru
      _
    // Predicated region
    $region42: #{tpu_custom_call.1} parent=1 // pred_check
      _
    $region43: #{tpu_custom_call.1} parent=1 // pred_check_branch
      %97 = sbr.rel (0) target = $region45
    $region44: #{tpu_custom_call.1} parent=1 // pred_region
      %99 = dma.done [#allocation7], 32
    $region45: #{tpu_custom_call.1} parent=1 // pred_fallthru
      _
    // Predicated region
    $region46: #{tpu_custom_call.1} parent=1 // pred_check
      _
    $region47: #{tpu_custom_call.1} parent=1 // pred_check_branch
      %101 = sbr.rel (0) target = $region49
    $region48: #{tpu_custom_call.1} parent=1 // pred_region
      %103 = dma.done [#allocation7], 1024
    $region49: #{tpu_custom_call.1} parent=1 // pred_fallthru
      _
    // Predicated region
    $region50: #{tpu_custom_call.1} parent=1 // pred_check
      _
    $region51: #{tpu_custom_call.1} parent=1 // pred_check_branch
      %105 = sbr.rel (0) target = $region53
    $region52: #{tpu_custom_call.1} parent=1 // pred_region
      %107 = dma.done [#allocation10], 1024
    $region53: #{tpu_custom_call.1} parent=1 // pred_fallthru
      _
    // Predicated region
    $region54: #{tpu_custom_call.1} parent=1 // pred_check
      _
    $region55: #{tpu_custom_call.1} parent=1 // pred_check_branch
      %109 = sbr.rel (0) target = $region57
    $region56: #{tpu_custom_call.1} parent=1 // pred_region
      %111 = dma.done [#allocation10], 1024
    $region57: #{tpu_custom_call.1} parent=1 // pred_fallthru
      _
    %p113 = scmp.eq.s32.totalorder 0, 0
    // Predicated region
    $region58: #{tpu_custom_call.1} parent=1 // pred_check
      %p114 = pneg %p113
    $region59: #{tpu_custom_call.1} parent=1 // pred_check_branch
      %116 = sbr.rel (%p114) target = $region61
    $region60: #{tpu_custom_call.1} parent=1 // pred_region
      %vm117 = vcmask 31744
      %118 = vst.msk [vmem:[#allocation2] sm:$0xff] %vm117, 0.0
    $region61: #{tpu_custom_call.1} parent=1 // pred_fallthru
      _
    %v119 = vld [vmem:[#allocation2] sm:$0xff]
    %v120 = vld [vmem:[#allocation3] sm:$0xf]
    %v121 = vld [vmem:[#allocation3 + $0x4] sm:$0xf]
    %v122 = vld [vmem:[#allocation3 + $0x8] sm:$0xf]
    %v123 = vld [vmem:[#allocation3 + $0xc] sm:$0xf]
    %v124 = vld [vmem:[#allocation3 + $0x10] sm:$0xf]
    %v125 = vld [vmem:[#allocation3 + $0x14] sm:$0xf]
    %v126 = vld [vmem:[#allocation3 + $0x18] sm:$0xf]
    %v127 = vld [vmem:[#allocation3 + $0x1c] sm:$0xf]
    %v128 = vunpack.c.l.bf16 %v120
    %v129 = vunpack.c.l.bf16 %v121
    %v130 = vunpack.c.l.bf16 %v122
    %v131 = vunpack.c.l.bf16 %v123
    %v132 = vunpack.c.l.bf16 %v124
    %v133 = vunpack.c.l.bf16 %v125
    %v134 = vunpack.c.l.bf16 %v126
    %v135 = vunpack.c.l.bf16 %v127
    %144 = vst [vmem:[#allocation1] ss:$2 sm:$0xff] %v128
    %v145 = vld.sshfl [vmem:[#allocation1] sm:$0xff pattern:$0x75316420]
    %v146 = vld.sshfl [vmem:[#allocation1 + $0x8] sm:$0xff pattern:$0x75316420]
    %s147 = scalar_lea.vmem [#allocation1], 16
    %148 = vst [vmem:[%s147] ss:$2 sm:$0xff] %v129
    %v149 = vld.sshfl [vmem:[#allocation1 + $0x10] sm:$0xff pattern:$0x75316420]
    %v150 = vld.sshfl [vmem:[#allocation1 + $0x18] sm:$0xff pattern:$0x75316420]
    %s151 = scalar_lea.vmem [#allocation1], 32
    %152 = vst [vmem:[%s151] ss:$2 sm:$0xff] %v130
    %v153 = vld.sshfl [vmem:[#allocation1 + $0x20] sm:$0xff pattern:$0x75316420]
    %v154 = vld.sshfl [vmem:[#allocation1 + $0x28] sm:$0xff pattern:$0x75316420]
    %s155 = scalar_lea.vmem [#allocation1], 48
    %156 = vst [vmem:[%s155] ss:$2 sm:$0xff] %v131
    %v157 = vld.sshfl [vmem:[#allocation1 + $0x30] sm:$0xff pattern:$0x75316420]
    %v158 = vld.sshfl [vmem:[#allocation1 + $0x38] sm:$0xff pattern:$0x75316420]
    %159 = vst [vmem:[#allocation1] ss:$2 sm:$0xff] %v132
    %v160 = vld.sshfl [vmem:[#allocation1] sm:$0xff pattern:$0x75316420]
    %v161 = vld.sshfl [vmem:[#allocation1 + $0x8] sm:$0xff pattern:$0x75316420]
    %162 = vst [vmem:[%s147] ss:$2 sm:$0xff] %v133
    %v163 = vld.sshfl [vmem:[#allocation1 + $0x10] sm:$0xff pattern:$0x75316420]
    %v164 = vld.sshfl [vmem:[#allocation1 + $0x18] sm:$0xff pattern:$0x75316420]
    %165 = vst [vmem:[%s151] ss:$2 sm:$0xff] %v134
    %v166 = vld.sshfl [vmem:[#allocation1 + $0x20] sm:$0xff pattern:$0x75316420]
    %v167 = vld.sshfl [vmem:[#allocation1 + $0x28] sm:$0xff pattern:$0x75316420]
    %168 = vst [vmem:[%s155] ss:$2 sm:$0xff] %v135
    %v169 = vld.sshfl [vmem:[#allocation1 + $0x30] sm:$0xff pattern:$0x75316420]
    %v170 = vld.sshfl [vmem:[#allocation1 + $0x38] sm:$0xff pattern:$0x75316420]
    %vm187 = vcmask 1043456
    %v188 = vsel %vm187, %v145, 0.0
    %v189 = vsel %vm187, %v146, 0.0
    %v190 = vadd.f32 %v188, %v189
    %191 = vadd.xlane.f32.xlu0 %v190
    %v192 = vpop.xlane.xlu0 %191
    %v193 = vsel %vm187, %v149, 0.0
    %v194 = vsel %vm187, %v150, 0.0
    %v195 = vadd.f32 %v193, %v194
    %196 = vadd.xlane.f32.xlu0 %v195
    %v197 = vpop.xlane.xlu0 %196
    %v198 = vsel %vm187, %v153, 0.0
    %v199 = vsel %vm187, %v154, 0.0
    %v200 = vadd.f32 %v198, %v199
    %201 = vadd.xlane.f32.xlu0 %v200
    %v202 = vpop.xlane.xlu0 %201
    %v203 = vsel %vm187, %v157, 0.0
    %v204 = vsel %vm187, %v158, 0.0
    %v205 = vadd.f32 %v203, %v204
    %206 = vadd.xlane.f32.xlu0 %v205
    %v207 = vpop.xlane.xlu0 %206
    %v208 = vsel %vm187, %v160, 0.0
    %v209 = vsel %vm187, %v161, 0.0
    %v210 = vadd.f32 %v208, %v209
    %211 = vadd.xlane.f32.xlu0 %v210
    %v212 = vpop.xlane.xlu0 %211
    %v213 = vsel %vm187, %v163, 0.0
    %v214 = vsel %vm187, %v164, 0.0
    %v215 = vadd.f32 %v213, %v214
    %216 = vadd.xlane.f32.xlu0 %v215
    %v217 = vpop.xlane.xlu0 %216
    %v218 = vsel %vm187, %v166, 0.0
    %v219 = vsel %vm187, %v167, 0.0
    %v220 = vadd.f32 %v218, %v219
    %221 = vadd.xlane.f32.xlu0 %v220
    %v222 = vpop.xlane.xlu0 %221
    %v223 = vsel %vm187, %v169, 0.0
    %v224 = vsel %vm187, %v170, 0.0
    %v225 = vadd.f32 %v223, %v224
    %226 = vadd.xlane.f32.xlu0 %v225
    %v227 = vpop.xlane.xlu0 %226
    %v236 = vlaneseq
    %v237 = vand.u32 %v236, 127
    %v238 = vperm.slane %v192, %v237
    %v239 = vperm.slane %v197, %v237
    %v240 = vperm.slane %v202, %v237
    %v241 = vperm.slane %v207, %v237
    %v242 = vperm.slane %v212, %v237
    %v243 = vperm.slane %v217, %v237
    %v244 = vperm.slane %v222, %v237
    %v245 = vperm.slane %v227, %v237
    %vm246 = vcmask 1041409
    %v247 = vsel %vm246, %v239, %v238
    %vm248 = vcmask 1042434
    %v249 = vsel %vm248, %v240, %v247
    %vm250 = vcmask 1043459
    %v251 = vsel %vm250, %v241, %v249
    %vm252 = vcmask 1044484
    %v253 = vsel %vm252, %v242, %v251
    %vm254 = vcmask 1045509
    %v255 = vsel %vm254, %v243, %v253
    %vm256 = vcmask 1046534
    %v257 = vsel %vm256, %v244, %v255
    %vm258 = vcmask 1047559
    %v259 = vsel %vm258, %v245, %v257
    %v261 = vadd.f32 %v119, %v259
    %vm262 = vcmask 31744
    %263 = vst.msk [vmem:[#allocation2] sm:$0xff] %vm262, %v261
    // Predicated region
    $region62: #{tpu_custom_call.1} parent=1 // pred_check
      %p264 = pneg %p113
    $region63: #{tpu_custom_call.1} parent=1 // pred_check_branch
      %266 = sbr.rel (%p264) target = $region65
    $region64: #{tpu_custom_call.1} parent=1 // pred_region
      %v267 = vld [vmem:[#allocation2] sm:$0xff]
      %v268 = vpack.c.bf16 %v267, %v267
      %v269 = vld [vmem:[#allocation6] sm:$0x3]
      %v270 = vld [vmem:[%s2] sm:$0x1]
      %v272 = vperm.slane %v270, 0
      %v275 = vsel %vm262, %v268, 0
      %vm277 = vcmask 1041408
      %v279 = vsel %vm277, %v269, 0
      %281 = vmatpush.bf16.msra.mxu0 0
      %282 = vmatpush.bf16.msra.mxu0 0
      %283 = vmatpush.bf16.msra.mxu0 0
      %284 = vmatpush.bf16.msra.mxu0 0
      %285 = vmatpush.bf16.msra.mxu0 0
      %286 = vmatpush.bf16.msra.mxu0 0
      %287 = vmatpush.bf16.msra.mxu0 0
      %288 = vmatpush.bf16.msra.mxu0 %v279
      %289 = vmatmul.bf16.gmra.mxu0 %v275
      %v290 = vpop.f32.mrf.mxu0
      %v291 = vadd.f32 %v272, %v290
      %v292 = vpop.f32.mrf.mxu0
      %293 = vdwg.mxu0
      %v294 = vmax.f32 %v291, 0.0
      %v295 = vpack.c.bf16 %v294, %v294
      %v296 = vld [vmem:[#allocation8] sm:$0xf]
      %v297 = vld [vmem:[#allocation8 + $0x4] sm:$0xf]
      %v298 = vld [vmem:[#allocation8 + $0x8] sm:$0xf]
      %v299 = vld [vmem:[#allocation8 + $0xc] sm:$0xf]
      %v300 = vld [vmem:[#allocation8 + $0x10] sm:$0xf]
      %v301 = vld [vmem:[#allocation8 + $0x14] sm:$0xf]
      %v302 = vld [vmem:[#allocation8 + $0x18] sm:$0xf]
      %v303 = vld [vmem:[#allocation8 + $0x1c] sm:$0xf]
      %v304 = vld [vmem:[#allocation8 + $0x20] sm:$0xf]
      %v305 = vld [vmem:[#allocation8 + $0x24] sm:$0xf]
      %v306 = vld [vmem:[#allocation8 + $0x28] sm:$0xf]
      %v307 = vld [vmem:[#allocation8 + $0x2c] sm:$0xf]
      %v308 = vld [vmem:[#allocation8 + $0x30] sm:$0xf]
      %v309 = vld [vmem:[#allocation8 + $0x34] sm:$0xf]
      %v310 = vld [vmem:[#allocation8 + $0x38] sm:$0xf]
      %v311 = vld [vmem:[#allocation8 + $0x3c] sm:$0xf]
      %v312 = vld [vmem:[%s4] sm:$0x1]
      %v314 = vperm.slane %v312, 0
      %v332 = vunpack.c.l.b16 %v296
      %v333 = vunpack.c.l.b16 %v297
      %v334 = vunpack.c.l.b16 %v298
      %v335 = vunpack.c.l.b16 %v299
      %v336 = vunpack.c.l.b16 %v300
      %v337 = vunpack.c.l.b16 %v301
      %v338 = vunpack.c.l.b16 %v302
      %v339 = vunpack.c.l.b16 %v303
      %v340 = vunpack.c.l.b16 %v304
      %v341 = vunpack.c.l.b16 %v305
      %v342 = vunpack.c.l.b16 %v306
      %v343 = vunpack.c.l.b16 %v307
      %v344 = vunpack.c.l.b16 %v308
      %v345 = vunpack.c.l.b16 %v309
      %v346 = vunpack.c.l.b16 %v310
      %v347 = vunpack.c.l.b16 %v311
      %v348 = vpack.c.b16 %v333, %v332
      %v349 = vpack.c.b16 %v335, %v334
      %v350 = vpack.c.b16 %v337, %v336
      %v351 = vpack.c.b16 %v339, %v338
      %v352 = vpack.c.b16 %v341, %v340
      %v353 = vpack.c.b16 %v343, %v342
      %v354 = vpack.c.b16 %v345, %v344
      %v355 = vpack.c.b16 %v347, %v346
      %364 = vmatpush.bf16.msra.mxu0 %v355
      %365 = vmatpush.bf16.msra.mxu0 %v354
      %366 = vmatpush.bf16.msra.mxu0 %v353
      %367 = vmatpush.bf16.msra.mxu0 %v352
      %368 = vmatpush.bf16.msra.mxu0 %v351
      %369 = vmatpush.bf16.msra.mxu0 %v350
      %370 = vmatpush.bf16.msra.mxu0 %v349
      %371 = vmatpush.bf16.msra.mxu0 %v348
      %372 = vmatmul.bf16.gmra.mxu0 %v295
      %v373 = vpop.f32.mrf.mxu0
      %v374 = vadd.f32 %v314, %v373
      %v375 = vpop.f32.mrf.mxu0
      %376 = vdwg.mxu0
      %377 = vst [vmem:[#allocation12] sm:$0xff] %v374
      %v378 = vld [vmem:[#allocation9] sm:$0xf]
      %v379 = vld [vmem:[#allocation9 + $0x4] sm:$0xf]
      %v380 = vld [vmem:[#allocation9 + $0x8] sm:$0xf]
      %v381 = vld [vmem:[#allocation9 + $0xc] sm:$0xf]
      %v382 = vld [vmem:[#allocation9 + $0x10] sm:$0xf]
      %v383 = vld [vmem:[#allocation9 + $0x14] sm:$0xf]
      %v384 = vld [vmem:[#allocation9 + $0x18] sm:$0xf]
      %v385 = vld [vmem:[#allocation9 + $0x1c] sm:$0xf]
      %v386 = vld [vmem:[#allocation9 + $0x20] sm:$0xf]
      %v387 = vld [vmem:[#allocation9 + $0x24] sm:$0xf]
      %v388 = vld [vmem:[#allocation9 + $0x28] sm:$0xf]
      %v389 = vld [vmem:[#allocation9 + $0x2c] sm:$0xf]
      %v390 = vld [vmem:[#allocation9 + $0x30] sm:$0xf]
      %v391 = vld [vmem:[#allocation9 + $0x34] sm:$0xf]
      %v392 = vld [vmem:[#allocation9 + $0x38] sm:$0xf]
      %v393 = vld [vmem:[#allocation9 + $0x3c] sm:$0xf]
      %v394 = vld [vmem:[%s6] sm:$0x1]
      %v396 = vperm.slane %v394, 0
      %v414 = vunpack.c.l.b16 %v378
      %v415 = vunpack.c.l.b16 %v379
      %v416 = vunpack.c.l.b16 %v380
      %v417 = vunpack.c.l.b16 %v381
      %v418 = vunpack.c.l.b16 %v382
      %v419 = vunpack.c.l.b16 %v383
      %v420 = vunpack.c.l.b16 %v384
      %v421 = vunpack.c.l.b16 %v385
      %v422 = vunpack.c.l.b16 %v386
      %v423 = vunpack.c.l.b16 %v387
      %v424 = vunpack.c.l.b16 %v388
      %v425 = vunpack.c.l.b16 %v389
      %v426 = vunpack.c.l.b16 %v390
      %v427 = vunpack.c.l.b16 %v391
      %v428 = vunpack.c.l.b16 %v392
      %v429 = vunpack.c.l.b16 %v393
      %v430 = vpack.c.b16 %v415, %v414
      %v431 = vpack.c.b16 %v417, %v416
      %v432 = vpack.c.b16 %v419, %v418
      %v433 = vpack.c.b16 %v421, %v420
      %v434 = vpack.c.b16 %v423, %v422
      %v435 = vpack.c.b16 %v425, %v424
      %v436 = vpack.c.b16 %v427, %v426
      %v437 = vpack.c.b16 %v429, %v428
      %446 = vmatpush.bf16.msra.mxu0 %v437
      %447 = vmatpush.bf16.msra.mxu0 %v436
      %448 = vmatpush.bf16.msra.mxu0 %v435
      %449 = vmatpush.bf16.msra.mxu0 %v434
      %450 = vmatpush.bf16.msra.mxu0 %v433
      %451 = vmatpush.bf16.msra.mxu0 %v432
      %452 = vmatpush.bf16.msra.mxu0 %v431
      %453 = vmatpush.bf16.msra.mxu0 %v430
      %454 = vmatmul.bf16.gmra.mxu0 %v295
      %v455 = vpop.f32.mrf.mxu0
      %v456 = vadd.f32 %v396, %v455
      %v457 = vpop.f32.mrf.mxu0
      %458 = vdwg.mxu0
      %v459 = vmul.f32 %v456, 0.1
      %v460 = vmax.f32 %v456, %v459
      %v461 = vpack.c.bf16 %v460, %v460
      %v462 = vld [vmem:[#allocation11] sm:$0xf]
      %v463 = vld [vmem:[#allocation11 + $0x4] sm:$0xf]
      %v464 = vld [vmem:[#allocation11 + $0x8] sm:$0xf]
      %v465 = vld [vmem:[#allocation11 + $0xc] sm:$0xf]
      %v466 = vld [vmem:[#allocation11 + $0x10] sm:$0xf]
      %v467 = vld [vmem:[#allocation11 + $0x14] sm:$0xf]
      %v468 = vld [vmem:[#allocation11 + $0x18] sm:$0xf]
      %v469 = vld [vmem:[#allocation11 + $0x1c] sm:$0xf]
      %v470 = vld [vmem:[#allocation11 + $0x20] sm:$0xf]
      %v471 = vld [vmem:[#allocation11 + $0x24] sm:$0xf]
      %v472 = vld [vmem:[#allocation11 + $0x28] sm:$0xf]
      %v473 = vld [vmem:[#allocation11 + $0x2c] sm:$0xf]
      %v474 = vld [vmem:[#allocation11 + $0x30] sm:$0xf]
      %v475 = vld [vmem:[#allocation11 + $0x34] sm:$0xf]
      %v476 = vld [vmem:[#allocation11 + $0x38] sm:$0xf]
      %v477 = vld [vmem:[#allocation11 + $0x3c] sm:$0xf]
      %v478 = vld [vmem:[%s8] sm:$0x1]
      %v480 = vperm.slane %v478, 0
      %v498 = vunpack.c.l.b16 %v462
      %v499 = vunpack.c.l.b16 %v463
      %v500 = vunpack.c.l.b16 %v464
      %v501 = vunpack.c.l.b16 %v465
      %v502 = vunpack.c.l.b16 %v466
      %v503 = vunpack.c.l.b16 %v467
      %v504 = vunpack.c.l.b16 %v468
      %v505 = vunpack.c.l.b16 %v469
      %v506 = vunpack.c.l.b16 %v470
      %v507 = vunpack.c.l.b16 %v471
      %v508 = vunpack.c.l.b16 %v472
      %v509 = vunpack.c.l.b16 %v473
      %v510 = vunpack.c.l.b16 %v474
      %v511 = vunpack.c.l.b16 %v475
      %v512 = vunpack.c.l.b16 %v476
      %v513 = vunpack.c.l.b16 %v477
      %v514 = vpack.c.b16 %v499, %v498
      %v515 = vpack.c.b16 %v501, %v500
      %v516 = vpack.c.b16 %v503, %v502
      %v517 = vpack.c.b16 %v505, %v504
      %v518 = vpack.c.b16 %v507, %v506
      %v519 = vpack.c.b16 %v509, %v508
      %v520 = vpack.c.b16 %v511, %v510
      %v521 = vpack.c.b16 %v513, %v512
      %530 = vmatpush.bf16.msra.mxu0 %v521
      %531 = vmatpush.bf16.msra.mxu0 %v520
      %532 = vmatpush.bf16.msra.mxu0 %v519
      %533 = vmatpush.bf16.msra.mxu0 %v518
      %534 = vmatpush.bf16.msra.mxu0 %v517
      %535 = vmatpush.bf16.msra.mxu0 %v516
      %536 = vmatpush.bf16.msra.mxu0 %v515
      %537 = vmatpush.bf16.msra.mxu0 %v514
      %538 = vmatmul.bf16.gmra.mxu0 %v461
      %v539 = vpop.f32.mrf.mxu0
      %v540 = vadd.f32 %v480, %v539
      %v541 = vpop.f32.mrf.mxu0
      %542 = vdwg.mxu0
      %v543 = vmul.f32 %v540, %v540
      %544 = vadd.xlane.f32.xlu0 %v543
      %v545 = vpop.xlane.xlu0 %544
      %v546 = vmax.f32 %v545, 1e-24
      %v547 = vrsqrt.pop %v546
      %v548 = vmul.f32 %v547, %v546
      %v549 = vmul.f32 %v548, %v547
      %v550 = vmul.f32 0.5, %v549
      %v551 = vsub.f32 1.5, %v550
      %v552 = vmul.f32 %v547, %v551
      %vm553 = vweird.f32 %v546
      %vm554 = vweird.f32 %v547
      %vm555 = vmor %vm553, %vm554
      %v556 = vsel %vm555, %v547, %v552
      %v557 = vmul.f32 %v540, %v556
      %558 = vst [vmem:[#allocation13] sm:$0xff] %v557
    $region65: #{tpu_custom_call.1} parent=1 // pred_fallthru
      _
    // Predicated region
    $region66: #{tpu_custom_call.1} parent=1 // pred_check
      _
    $region67: #{tpu_custom_call.1} parent=1 // pred_check_branch
      %560 = sbr.rel (0) target = $region69
    $region68: #{tpu_custom_call.1} parent=1 // pred_region
      %562 = vsyncadd [#allocation5], 0
      %s564 = sshll.u32 [#allocation12], 4
      %s565 = int_to_ptr.vmem [resolvable:$true] %s564
      %s566 = sshll.u32 %s9, 4
      %s567 = int_to_ptr.hbm [resolvable:$true] %s566
      %569 = dma.vmem_to_hbm [thread:$0]  %s565, 128, %s567, [#allocation5]
    $region69: #{tpu_custom_call.1} parent=1 // pred_fallthru
      _
    // Predicated region
    $region70: #{tpu_custom_call.1} parent=1 // pred_check
      _
    $region71: #{tpu_custom_call.1} parent=1 // pred_check_branch
      %571 = sbr.rel (0) target = $region73
    $region72: #{tpu_custom_call.1} parent=1 // pred_region
      %573 = vsyncadd [#allocation14], 0
      %s575 = sshll.u32 [#allocation13], 4
      %s576 = int_to_ptr.vmem [resolvable:$true] %s575
      %s577 = sshll.u32 %s10, 4
      %s578 = int_to_ptr.hbm [resolvable:$true] %s577
      %580 = dma.vmem_to_hbm [thread:$0]  %s576, 128, %s578, [#allocation14]
    $region73: #{tpu_custom_call.1} parent=1 // pred_fallthru
      _
    // Predicated region
    $region74: #{tpu_custom_call.1} parent=1 // pred_check
      _
    $region75: #{tpu_custom_call.1} parent=1 // pred_check_branch
      %582 = sbr.rel (0) target = $region77
    $region76: #{tpu_custom_call.1} parent=1 // pred_region
      %584 = dma.done [#allocation5], 128
    $region77: #{tpu_custom_call.1} parent=1 // pred_fallthru
      _
    // Predicated region
    $region78: #{tpu_custom_call.1} parent=1 // pred_check
      _
    $region79: #{tpu_custom_call.1} parent=1 // pred_check_branch
      %586 = sbr.rel (0) target = $region81
    $region80: #{tpu_custom_call.1} parent=1 // pred_region
      %588 = dma.done [#allocation14], 128
    $region81: #{tpu_custom_call.1} parent=1 // pred_fallthru
      _
    %589 = vsyncpa [#allocation4], 1
    %590 = vsyncpa [#allocation7], 1
    %591 = vsyncpa [#allocation10], 1
    %592 = vsyncpa [#allocation5], 1
    %593 = vsyncpa [#allocation14], 1

</llo_original>
